<compile_context>
chip_gen: v7x
topology: tpu7x:2x2x1
jax: 0.10.0
libtpu: 0.0.40
codegen_flags: <defaults>
</compile_context>

<pallas_src>
import jax
import jax.numpy as jnp
from jax.experimental import pallas as pl
from jax.experimental.pallas import tpu as pltpu


# ----------------------------------------------------------------------------
# Hardware-derived constants (import-time only; safe fallback if query fails).
# ----------------------------------------------------------------------------
def _vmem_capacity_bytes() -> int:
    try:
        info = pltpu.get_tpu_info()
        cap = int(getattr(info, "vmem_capacity_bytes", 0) or 0)
        if cap > 0:
            return cap
    except Exception:
        pass
    return 64 * 1024 * 1024  # conservative default (v7x per-TensorCore)


_MiB = 1024 * 1024
_VMEM_CAP = _vmem_capacity_bytes()
_BIG_VMEM = _VMEM_CAP >= 100 * _MiB              # v5e/v6e (128 MiB) vs v7x (64 MiB)
_ROW_CAP = 512 if _BIG_VMEM else 256             # row-tile cap per generation
_TK_CAP = 4096 if _BIG_VMEM else 2048            # reduction-tile cap (fallback path)
_RESIDENT_W_CAP = (32 if _BIG_VMEM else 16) * _MiB
_VMEM_BUDGET = int(0.70 * _VMEM_CAP)             # bytes the tile solver may use
_VMEM_LIMIT_CEIL = (100 if _BIG_VMEM else 48) * _MiB


def _round_up(x: int, m: int) -> int:
    return ((x + m - 1) // m) * m


def _choose_row_tile(n_rows: int, cap: int) -> tuple[int, int]:
    """Pick (tm, n_pad); n_rows and cap are multiples of 8.

    Prefers a tile that divides n_rows exactly (no over-padding); only pads up
    to the cap when the wasted rows are tiny (<= ~6%)."""
    if n_rows <= cap:
        return n_rows, n_rows
    best_div = 8
    for tm in range(cap, 7, -8):
        if n_rows % tm == 0:
            best_div = tm
            break
    padded = _round_up(n_rows, cap)
    waste = padded - n_rows
    if best_div >= cap // 2 or waste > max(n_rows // 16, 8):
        return best_div, n_rows
    return cap, padded


def _solve_ktiles(f_pad: int, kp: int, extra_kp_rows: int) -> tuple[int, int]:
    """Pick (tk, tm_cap) for the K-tiled fallback within the VMEM budget.

    tk is a multiple of 128 dividing f_pad; tm_cap the largest multiple-of-8
    row tile keeping double-buffered tiles under the budget at that tk."""
    fallback = None
    c = min(_TK_CAP, f_pad)
    c -= c % 128
    while c >= 128:
        if f_pad % c == 0:
            fixed = 4 * (2 * c * kp + 2 * kp)
            per_row = 4 * (2 * c + (2 + extra_kp_rows) * kp)
            tm_cap = max(0, _VMEM_BUDGET - fixed) // per_row
            tm_cap -= tm_cap % 8
            if tm_cap >= 64:
                return c, tm_cap
            if tm_cap >= 8 and fallback is None:
                fallback = (c, tm_cap)
        c -= 128
    return fallback if fallback is not None else (128, 8)


# ----------------------------------------------------------------------------
# Kernels
# ----------------------------------------------------------------------------
def _fc_resident_kernel(x_ref, w_ref, b_ref, out_ref):
    # x_ref: (tm, F)  w_ref: (F, Kp) resident  b_ref: (1, Kp)  out_ref: (tm, Kp)
    acc = jnp.dot(x_ref[...], w_ref[...], preferred_element_type=jnp.float32)
    out_ref[...] = (acc + b_ref[...]).astype(out_ref.dtype)


def _fc_ktiled_f32_kernel(x_ref, w_ref, b_ref, out_ref):
    # float32 output: accumulate directly into the resident output block.
    k = pl.program_id(1)

    @pl.when(k == 0)
    def _():
        out_ref[...] = jnp.zeros_like(out_ref)

    out_ref[...] += jnp.dot(x_ref[...], w_ref[...],
                            preferred_element_type=jnp.float32)

    @pl.when(k == pl.num_programs(1) - 1)
    def _():
        out_ref[...] += b_ref[...]


def _fc_ktiled_acc_kernel(x_ref, w_ref, b_ref, out_ref, acc_ref):
    # Non-f32 output: accumulate in an f32 scratch, cast once at the end.
    k = pl.program_id(1)

    @pl.when(k == 0)
    def _():
        acc_ref[...] = jnp.zeros_like(acc_ref)

    acc_ref[...] += jnp.dot(x_ref[...], w_ref[...],
                            preferred_element_type=jnp.float32)

    @pl.when(k == pl.num_programs(1) - 1)
    def _():
        out_ref[...] = (acc_ref[...] + b_ref[...]).astype(out_ref.dtype)


# ----------------------------------------------------------------------------
# Wrapper
# ----------------------------------------------------------------------------
@jax.jit
def fully_connected_forward(x_nchw, weight, bias):
    """Forward pass of `fully_connected`.

    x_nchw : (N, C, H, W)
    weight : (num_classes, num_ftrs)  torch nn.Linear layout (NOT transposed)
    bias   : (num_classes,)
    returns (out_1, out_3) = (flattened features, fc_4 logits)
    """
    # TODO(synk): the backbone `self.model` (DenseNet feature extractor) is an
    # externally supplied module; it is represented here as identity.
    n = x_nchw.shape[0]
    x_flat = jnp.reshape(x_nchw, (n, -1))            # torch.flatten(x, 1)
    out_1 = x_flat

    num_ftrs = x_flat.shape[1]
    num_classes = weight.shape[0]
    out_dtype = x_flat.dtype
    f32_out = out_dtype == jnp.float32

    # ---- class dim: lane-dense padding ------------------------------------
    kp = _round_up(num_classes, 128)
    w_p = weight if kp == num_classes else jnp.pad(
        weight, ((0, kp - num_classes), (0, 0)))
    b_p = bias if kp == num_classes else jnp.pad(bias, (0, kp - num_classes))
    w_t = jnp.transpose(w_p)                         # (F, Kp): one-time transpose
    b2d = b_p.reshape(1, kp)

    # ---- row dim: pad only to the 8-sublane tile ---------------------------
    n_pad8 = _round_up(max(n, 1), 8)
    itemsize = 4  # budget everything at f32 width (conservative)

    # ---- path selection -----------------------------------------------------
    weight_bytes = itemsize * num_ftrs * kp
    res_fixed = itemsize * (2 * num_ftrs * kp + 2 * kp)     # weight + bias buffers
    res_per_row = itemsize * (2 * num_ftrs + 2 * kp)        # x tile + out tile (2x)
    use_resident = (weight_bytes <= _RESIDENT_W_CAP
                    and res_fixed + 8 * res_per_row <= _VMEM_BUDGET)

    if use_resident:
        # -- resident-weight path: grid over rows only -----------------------
        tm_cap = (_VMEM_BUDGET - res_fixed) // res_per_row
        tm_cap -= tm_cap % 8
        cap = max(8, min(_ROW_CAP, tm_cap))
        tm, n_pad = _choose_row_tile(n_pad8, cap)
        if n_pad // tm < 2 and n_pad % 16 == 0:
            tm = n_pad // 2          # give v7x's second TensorCore work

        x_p = x_flat if n_pad == n else jnp.pad(x_flat, ((0, n_pad - n), (0, 0)))

        need = res_fixed + res_per_row * tm
        vmem_limit = min(_VMEM_LIMIT_CEIL, max(32 * _MiB, int(1.25 * need)))

        out_padded = pl.pallas_call(
            _fc_resident_kernel,
            out_shape=jax.ShapeDtypeStruct((n_pad, kp), out_dtype),
            grid_spec=pltpu.PrefetchScalarGridSpec(
                num_scalar_prefetch=0,
                grid=(n_pad // tm,),
                in_specs=[
                    pl.BlockSpec((tm, num_ftrs), lambda i: (i, 0)),   # x (streamed)
                    pl.BlockSpec((num_ftrs, kp), lambda i: (0, 0)),   # weight (resident)
                    pl.BlockSpec((1, kp), lambda i: (0, 0)),          # bias (resident)
                ],
                out_specs=pl.BlockSpec((tm, kp), lambda i: (i, 0)),
            ),
            compiler_params=pltpu.CompilerParams(
                dimension_semantics=("parallel",),
                vmem_limit_bytes=vmem_limit),
        )(x_p, w_t, b2d)
    else:
        # -- K-tiled fallback: very large F * Kp, stream the weight along F --
        f_pad = _round_up(num_ftrs, 128)
        x_f = x_flat if f_pad == num_ftrs else jnp.pad(
            x_flat, ((0, 0), (0, f_pad - num_ftrs)))
        w_f = w_t if f_pad == num_ftrs else jnp.pad(
            w_t, ((0, f_pad - num_ftrs), (0, 0)))

        extra = 0 if f32_out else 1            # f32 acc scratch only for non-f32 out
        tk, tm_cap = _solve_ktiles(f_pad, kp, extra)
        cap = max(8, min(_ROW_CAP, tm_cap))
        tm, n_pad = _choose_row_tile(n_pad8, cap)
        if n_pad // tm < 2 and n_pad % 16 == 0:
            tm = n_pad // 2

        x_p = x_f if n_pad == n else jnp.pad(x_f, ((0, n_pad - n), (0, 0)))

        fixed = itemsize * (2 * tk * kp + 2 * kp)
        per_row = itemsize * (2 * tk + (2 + extra) * kp)
        need = fixed + per_row * tm
        vmem_limit = min(_VMEM_LIMIT_CEIL, max(32 * _MiB, int(1.25 * need)))

        kernel = _fc_ktiled_f32_kernel if f32_out else _fc_ktiled_acc_kernel
        scratch = [] if f32_out else [pltpu.VMEM((tm, kp), jnp.float32)]

        out_padded = pl.pallas_call(
            kernel,
            out_shape=jax.ShapeDtypeStruct((n_pad, kp), out_dtype),
            grid_spec=pltpu.PrefetchScalarGridSpec(
                num_scalar_prefetch=0,
                grid=(n_pad // tm, f_pad // tk),
                in_specs=[
                    pl.BlockSpec((tm, tk), lambda i, k: (i, k)),      # x tile
                    pl.BlockSpec((tk, kp), lambda i, k: (k, 0)),      # weight slab
                    pl.BlockSpec((1, kp), lambda i, k: (0, 0)),       # bias (resident)
                ],
                out_specs=pl.BlockSpec((tm, kp), lambda i, k: (i, 0)),
                scratch_shapes=scratch,
            ),
            compiler_params=pltpu.CompilerParams(
                dimension_semantics=("parallel", "arbitrary"),
                vmem_limit_bytes=vmem_limit),
        )(x_p, w_f, b2d)

    out_3 = out_padded[:n, :num_classes]
    return out_1, out_3


if __name__ == "__main__":
    key = jax.random.PRNGKey(0)
    k_x, k_w, k_b = jax.random.split(key, 3)

    # Small shapes consistent with the module: batch=2, channels=4, spatial=16
    # -> num_ftrs = 4*16*16 = 1024, num_classes = 8.
    N, C, H, W = 2, 4, 16, 16
    num_ftrs = C * H * W
    num_classes = 8

    x = jax.random.normal(k_x, (N, C, H, W), dtype=jnp.float32)

    # Deterministic torch-style Linear init: U(-1/sqrt(in), 1/sqrt(in)).
    bound = 1.0 / jnp.sqrt(jnp.float32(num_ftrs))
    weight = jax.random.uniform(k_w, (num_classes, num_ftrs),
                                minval=-bound, maxval=bound, dtype=jnp.float32)
    bias = jax.random.uniform(k_b, (num_classes,),
                              minval=-bound, maxval=bound, dtype=jnp.float32)

    out_1, out_3 = fully_connected_forward(x, weight, bias)
    jax.block_until_ready((out_1, out_3))

    # Sanity check against plain-JAX reference.
    ref_1 = x.reshape(N, -1)
    ref_3 = ref_1 @ weight.T + bias
    assert out_1.shape == (N, num_ftrs) and out_3.shape == (N, num_classes)
    assert jnp.allclose(out_1, ref_1)
    assert jnp.allclose(out_3, ref_3, atol=1e-5, rtol=1e-5)

    print("KERNEL_OK")
</pallas_src>

<mosaic_0001>
module attributes {stable_mosaic.version = 11 : i64} {
  func.func @_fc_resident_kernel(%arg0: i32, %arg1: memref<8x1024xf32, #tpu.memory_space<vmem>>, %arg2: memref<1024x128xf32, #tpu.memory_space<vmem>>, %arg3: memref<1x128xf32, #tpu.memory_space<vmem>>, %arg4: memref<8x128xf32, #tpu.memory_space<vmem>>) attributes {dimension_semantics = [#tpu.dimension_semantics<parallel>], iteration_bounds = array<i64: 1>, scalar_prefetch = 0 : i64, scratch_operands = 0 : i64, tpu.core_type = #tpu.core_type<tc>, window_params = [{transform_indices = @transform_0, window_bounds = array<i64: 8, 1024>}, {pipeline_mode = #tpu.pipeline_mode<synchronous>, transform_indices = @transform_1, window_bounds = array<i64: 1024, 128>}, {pipeline_mode = #tpu.pipeline_mode<synchronous>, transform_indices = @transform_2, window_bounds = array<i64: 1, 128>}, {transform_indices = @transform_3, window_bounds = array<i64: 8, 128>}]} {
    %c0 = arith.constant 0 : index
    %c0_0 = arith.constant 0 : index
    %0 = vector.load %arg1[%c0, %c0_0] : memref<8x1024xf32, #tpu.memory_space<vmem>>, vector<8x1024xf32>
    %c0_1 = arith.constant 0 : index
    %c0_2 = arith.constant 0 : index
    %1 = vector.load %arg2[%c0_1, %c0_2] : memref<1024x128xf32, #tpu.memory_space<vmem>>, vector<1024x128xf32>
    %cst = arith.constant dense<0.000000e+00> : vector<8x128xf32>
    %2 = tpu.matmul %0, %1, %cst {dimension_numbers = #tpu.dot_dimension_numbers<[1], [0], [0], [1], [0, 0, 1, 1], [], []>} : vector<8x1024xf32>, vector<1024x128xf32>, vector<8x128xf32> -> vector<8x128xf32>
    %c0_3 = arith.constant 0 : index
    %c0_4 = arith.constant 0 : index
    %3 = vector.load %arg3[%c0_3, %c0_4] : memref<1x128xf32, #tpu.memory_space<vmem>>, vector<1x128xf32>
    %4 = vector.broadcast %3 : vector<1x128xf32> to vector<8x128xf32>
    %5 = arith.addf %2, %4 : vector<8x128xf32>
    %c0_5 = arith.constant 0 : index
    %c0_6 = arith.constant 0 : index
    %6 = vector.load %arg4[%c0_5, %c0_6] : memref<8x128xf32, #tpu.memory_space<vmem>>, vector<8x128xf32>
    tpu.vector_store %arg4[%c0_5, %c0_6], %5 {strides = array<i32>} : memref<8x128xf32, #tpu.memory_space<vmem>>, vector<8x128xf32>,
    return
  }
  func.func @transform_0(%arg0: i32) -> (i32, i32) {
    %c0_i32 = arith.constant 0 : i32
    %c0_i32_0 = arith.constant 0 : i32
    return %arg0, %c0_i32 : i32, i32
  }
  func.func @transform_1(%arg0: i32) -> (i32, i32) {
    %c0_i32 = arith.constant 0 : i32
    %c0_i32_0 = arith.constant 0 : i32
    %c0_i32_1 = arith.constant 0 : i32
    return %c0_i32, %c0_i32_0 : i32, i32
  }
  func.func @transform_2(%arg0: i32) -> (i32, i32) {
    %c0_i32 = arith.constant 0 : i32
    %c0_i32_0 = arith.constant 0 : i32
    %c0_i32_1 = arith.constant 0 : i32
    return %c0_i32, %c0_i32_0 : i32, i32
  }
  func.func @transform_3(%arg0: i32) -> (i32, i32) {
    %c0_i32 = arith.constant 0 : i32
    %c0_i32_0 = arith.constant 0 : i32
    return %arg0, %c0_i32 : i32, i32
  }
}

</mosaic_0001>

<llo_original>
// kernel: fully_connected_forward.1
$region0: #{fully_connected_forward.1}
  #allocation0 [shape = 'u32[]', space=smem, size = 0x4, offset = 0x4, fixed_abs, tag = 'smem constant byte address 0x4 - core index']
  #allocation1 [shape = 'u32[144,128]{1,0:T(1,128)}', space=vmem, size = 0x12000, scoped, tag = 'internal scratch']
  %s0 = inlined_call_operand.vmem [shape: f32[8,1024], index: 0, kind: input, shape index: {}]
  %s1 = inlined_call_operand.vmem [shape: f32[1024,128], index: 1, kind: input, shape index: {}]
  %s2 = inlined_call_operand.vmem [shape: f32[1,128], index: 2, kind: input, shape index: {}]
  %s3 = inlined_call_operand.vmem [shape: f32[8,128], index: 3, kind: output, shape index: {}]
  %s4 = sld [smem:[#allocation0]]
  $region22: #{fully_connected_forward.1} parent=0
    _
  %s6 = ssub.s32 1, %s4
  %s7 = scalar_select 0, %s6, %s4
  // Predicated region
  $region2: #{fully_connected_forward.1} parent=0 // pred_check
    _
  $region3: #{fully_connected_forward.1} parent=0 // pred_check_branch
    %9 = sbr.rel (0) target = $region5
  $region4: #{fully_connected_forward.1} parent=0 // pred_region
    _
  $region5: #{fully_connected_forward.1} parent=0 // pred_fallthru
    _
  // Predicated region
  $region6: #{fully_connected_forward.1} parent=0 // pred_check
    _
  $region7: #{fully_connected_forward.1} parent=0 // pred_check_branch
    %11 = sbr.rel (0) target = $region9
  $region8: #{fully_connected_forward.1} parent=0 // pred_region
    _
  $region9: #{fully_connected_forward.1} parent=0 // pred_fallthru
    _
  // Predicated region
  $region10: #{fully_connected_forward.1} parent=0 // pred_check
    _
  $region11: #{fully_connected_forward.1} parent=0 // pred_check_branch
    %13 = sbr.rel (0) target = $region13
  $region12: #{fully_connected_forward.1} parent=0 // pred_region
    _
  $region13: #{fully_connected_forward.1} parent=0 // pred_fallthru
    _
  %v14 = vld [vmem:[%s0] sm:$0xff]
  %v15 = vld [vmem:[%s0 + $0x8] sm:$0xff]
  %v16 = vld [vmem:[%s0 + $0x10] sm:$0xff]
  %v17 = vld [vmem:[%s0 + $0x18] sm:$0xff]
  %v18 = vld [vmem:[%s0 + $0x20] sm:$0xff]
  %v19 = vld [vmem:[%s0 + $0x28] sm:$0xff]
  %v20 = vld [vmem:[%s0 + $0x30] sm:$0xff]
  %v21 = vld [vmem:[%s0 + $0x38] sm:$0xff]
  %v22 = vld [vmem:[%s1] sm:$0xff]
  %v23 = vld [vmem:[%s1 + $0x8] sm:$0xff]
  %v24 = vld [vmem:[%s1 + $0x10] sm:$0xff]
  %v25 = vld [vmem:[%s1 + $0x18] sm:$0xff]
  %v26 = vld [vmem:[%s1 + $0x20] sm:$0xff]
  %v27 = vld [vmem:[%s1 + $0x28] sm:$0xff]
  %v28 = vld [vmem:[%s1 + $0x30] sm:$0xff]
  %v29 = vld [vmem:[%s1 + $0x38] sm:$0xff]
  %v30 = vld [vmem:[%s1 + $0x40] sm:$0xff]
  %v31 = vld [vmem:[%s1 + $0x48] sm:$0xff]
  %v32 = vld [vmem:[%s1 + $0x50] sm:$0xff]
  %v33 = vld [vmem:[%s1 + $0x58] sm:$0xff]
  %v34 = vld [vmem:[%s1 + $0x60] sm:$0xff]
  %v35 = vld [vmem:[%s1 + $0x68] sm:$0xff]
  %v36 = vld [vmem:[%s1 + $0x70] sm:$0xff]
  %v37 = vld [vmem:[%s1 + $0x78] sm:$0xff]
  %v38 = vld [vmem:[%s1 + $0x80] sm:$0xff]
  %v39 = vld [vmem:[%s1 + $0x88] sm:$0xff]
  %v40 = vld [vmem:[%s1 + $0x90] sm:$0xff]
  %v41 = vld [vmem:[%s1 + $0x98] sm:$0xff]
  %v42 = vld [vmem:[%s1 + $0xa0] sm:$0xff]
  %v43 = vld [vmem:[%s1 + $0xa8] sm:$0xff]
  %v44 = vld [vmem:[%s1 + $0xb0] sm:$0xff]
  %v45 = vld [vmem:[%s1 + $0xb8] sm:$0xff]
  %v46 = vld [vmem:[%s1 + $0xc0] sm:$0xff]
  %v47 = vld [vmem:[%s1 + $0xc8] sm:$0xff]
  %v48 = vld [vmem:[%s1 + $0xd0] sm:$0xff]
  %v49 = vld [vmem:[%s1 + $0xd8] sm:$0xff]
  %v50 = vld [vmem:[%s1 + $0xe0] sm:$0xff]
  %v51 = vld [vmem:[%s1 + $0xe8] sm:$0xff]
  %v52 = vld [vmem:[%s1 + $0xf0] sm:$0xff]
  %v53 = vld [vmem:[%s1 + $0xf8] sm:$0xff]
  %v54 = vld [vmem:[%s1 + $0x100] sm:$0xff]
  %v55 = vld [vmem:[%s1 + $0x108] sm:$0xff]
  %v56 = vld [vmem:[%s1 + $0x110] sm:$0xff]
  %v57 = vld [vmem:[%s1 + $0x118] sm:$0xff]
  %v58 = vld [vmem:[%s1 + $0x120] sm:$0xff]
  %v59 = vld [vmem:[%s1 + $0x128] sm:$0xff]
  %v60 = vld [vmem:[%s1 + $0x130] sm:$0xff]
  %v61 = vld [vmem:[%s1 + $0x138] sm:$0xff]
  %v62 = vld [vmem:[%s1 + $0x140] sm:$0xff]
  %v63 = vld [vmem:[%s1 + $0x148] sm:$0xff]
  %v64 = vld [vmem:[%s1 + $0x150] sm:$0xff]
  %v65 = vld [vmem:[%s1 + $0x158] sm:$0xff]
  %v66 = vld [vmem:[%s1 + $0x160] sm:$0xff]
  %v67 = vld [vmem:[%s1 + $0x168] sm:$0xff]
  %v68 = vld [vmem:[%s1 + $0x170] sm:$0xff]
  %v69 = vld [vmem:[%s1 + $0x178] sm:$0xff]
  %v70 = vld [vmem:[%s1 + $0x180] sm:$0xff]
  %v71 = vld [vmem:[%s1 + $0x188] sm:$0xff]
  %v72 = vld [vmem:[%s1 + $0x190] sm:$0xff]
  %v73 = vld [vmem:[%s1 + $0x198] sm:$0xff]
  %v74 = vld [vmem:[%s1 + $0x1a0] sm:$0xff]
  %v75 = vld [vmem:[%s1 + $0x1a8] sm:$0xff]
  %v76 = vld [vmem:[%s1 + $0x1b0] sm:$0xff]
  %v77 = vld [vmem:[%s1 + $0x1b8] sm:$0xff]
  %v78 = vld [vmem:[%s1 + $0x1c0] sm:$0xff]
  %v79 = vld [vmem:[%s1 + $0x1c8] sm:$0xff]
  %v80 = vld [vmem:[%s1 + $0x1d0] sm:$0xff]
  %v81 = vld [vmem:[%s1 + $0x1d8] sm:$0xff]
  %v82 = vld [vmem:[%s1 + $0x1e0] sm:$0xff]
  %v83 = vld [vmem:[%s1 + $0x1e8] sm:$0xff]
  %v84 = vld [vmem:[%s1 + $0x1f0] sm:$0xff]
  %v85 = vld [vmem:[%s1 + $0x1f8] sm:$0xff]
  %v86 = vld [vmem:[%s1 + $0x200] sm:$0xff]
  %v87 = vld [vmem:[%s1 + $0x208] sm:$0xff]
  %v88 = vld [vmem:[%s1 + $0x210] sm:$0xff]
  %v89 = vld [vmem:[%s1 + $0x218] sm:$0xff]
  %v90 = vld [vmem:[%s1 + $0x220] sm:$0xff]
  %v91 = vld [vmem:[%s1 + $0x228] sm:$0xff]
  %v92 = vld [vmem:[%s1 + $0x230] sm:$0xff]
  %v93 = vld [vmem:[%s1 + $0x238] sm:$0xff]
  %v94 = vld [vmem:[%s1 + $0x240] sm:$0xff]
  %v95 = vld [vmem:[%s1 + $0x248] sm:$0xff]
  %v96 = vld [vmem:[%s1 + $0x250] sm:$0xff]
  %v97 = vld [vmem:[%s1 + $0x258] sm:$0xff]
  %v98 = vld [vmem:[%s1 + $0x260] sm:$0xff]
  %v99 = vld [vmem:[%s1 + $0x268] sm:$0xff]
  %v100 = vld [vmem:[%s1 + $0x270] sm:$0xff]
  %v101 = vld [vmem:[%s1 + $0x278] sm:$0xff]
  %v102 = vld [vmem:[%s1 + $0x280] sm:$0xff]
  %v103 = vld [vmem:[%s1 + $0x288] sm:$0xff]
  %v104 = vld [vmem:[%s1 + $0x290] sm:$0xff]
  %v105 = vld [vmem:[%s1 + $0x298] sm:$0xff]
  %v106 = vld [vmem:[%s1 + $0x2a0] sm:$0xff]
  %v107 = vld [vmem:[%s1 + $0x2a8] sm:$0xff]
  %v108 = vld [vmem:[%s1 + $0x2b0] sm:$0xff]
  %v109 = vld [vmem:[%s1 + $0x2b8] sm:$0xff]
  %v110 = vld [vmem:[%s1 + $0x2c0] sm:$0xff]
  %v111 = vld [vmem:[%s1 + $0x2c8] sm:$0xff]
  %v112 = vld [vmem:[%s1 + $0x2d0] sm:$0xff]
  %v113 = vld [vmem:[%s1 + $0x2d8] sm:$0xff]
  %v114 = vld [vmem:[%s1 + $0x2e0] sm:$0xff]
  %v115 = vld [vmem:[%s1 + $0x2e8] sm:$0xff]
  %v116 = vld [vmem:[%s1 + $0x2f0] sm:$0xff]
  %v117 = vld [vmem:[%s1 + $0x2f8] sm:$0xff]
  %v118 = vld [vmem:[%s1 + $0x300] sm:$0xff]
  %v119 = vld [vmem:[%s1 + $0x308] sm:$0xff]
  %v120 = vld [vmem:[%s1 + $0x310] sm:$0xff]
  %v121 = vld [vmem:[%s1 + $0x318] sm:$0xff]
  %v122 = vld [vmem:[%s1 + $0x320] sm:$0xff]
  %v123 = vld [vmem:[%s1 + $0x328] sm:$0xff]
  %v124 = vld [vmem:[%s1 + $0x330] sm:$0xff]
  %v125 = vld [vmem:[%s1 + $0x338] sm:$0xff]
  %v126 = vld [vmem:[%s1 + $0x340] sm:$0xff]
  %v127 = vld [vmem:[%s1 + $0x348] sm:$0xff]
  %v128 = vld [vmem:[%s1 + $0x350] sm:$0xff]
  %v129 = vld [vmem:[%s1 + $0x358] sm:$0xff]
  %v130 = vld [vmem:[%s1 + $0x360] sm:$0xff]
  %v131 = vld [vmem:[%s1 + $0x368] sm:$0xff]
  %v132 = vld [vmem:[%s1 + $0x370] sm:$0xff]
  %v133 = vld [vmem:[%s1 + $0x378] sm:$0xff]
  %v134 = vld [vmem:[%s1 + $0x380] sm:$0xff]
  %v135 = vld [vmem:[%s1 + $0x388] sm:$0xff]
  %v136 = vld [vmem:[%s1 + $0x390] sm:$0xff]
  %v137 = vld [vmem:[%s1 + $0x398] sm:$0xff]
  %v138 = vld [vmem:[%s1 + $0x3a0] sm:$0xff]
  %v139 = vld [vmem:[%s1 + $0x3a8] sm:$0xff]
  %v140 = vld [vmem:[%s1 + $0x3b0] sm:$0xff]
  %v141 = vld [vmem:[%s1 + $0x3b8] sm:$0xff]
  %v142 = vld [vmem:[%s1 + $0x3c0] sm:$0xff]
  %v143 = vld [vmem:[%s1 + $0x3c8] sm:$0xff]
  %v144 = vld [vmem:[%s1 + $0x3d0] sm:$0xff]
  %v145 = vld [vmem:[%s1 + $0x3d8] sm:$0xff]
  %v146 = vld [vmem:[%s1 + $0x3e0] sm:$0xff]
  %v147 = vld [vmem:[%s1 + $0x3e8] sm:$0xff]
  %v148 = vld [vmem:[%s1 + $0x3f0] sm:$0xff]
  %v149 = vld [vmem:[%s1 + $0x3f8] sm:$0xff]
  %v150 = vld [vmem:[%s2] sm:$0x1]
  %v152 = vlaneseq
  %v153 = vshrl.u32 %v152, 7
  %v154 = vsub.s32 0, %v153
  %v155 = vrot.slane %v150, %v154
  %157 = vmatprep.subr.mxu0 0.0
  %158 = vmatpush1.msra.mxu0 %v22
  %159 = vmatprep.subr.mxu0 0.0
  %160 = vmatpush1.msra.mxu0 %v23
  %161 = vmatprep.subr.mxu0 0.0
  %162 = vmatpush1.msra.mxu0 %v24
  %163 = vmatprep.subr.mxu0 0.0
  %164 = vmatpush1.msra.mxu0 %v25
  %165 = vmatprep.subr.mxu0 0.0
  %166 = vmatpush1.msra.mxu0 %v26
  %167 = vmatprep.subr.mxu0 0.0
  %168 = vmatpush1.msra.mxu0 %v27
  %169 = vmatprep.subr.mxu0 0.0
  %170 = vmatpush1.msra.mxu0 %v28
  %171 = vmatprep.subr.mxu0 0.0
  %172 = vmatpush1.msra.mxu0 %v29
  %173 = vmatprep.subr.mxu0 0.0
  %174 = vmatpush1.msra.mxu0 %v30
  %175 = vmatprep.subr.mxu0 0.0
  %176 = vmatpush1.msra.mxu0 %v31
  %177 = vmatprep.subr.mxu0 0.0
  %178 = vmatpush1.msra.mxu0 %v32
  %179 = vmatprep.subr.mxu0 0.0
  %180 = vmatpush1.msra.mxu0 %v33
  %181 = vmatprep.subr.mxu0 0.0
  %182 = vmatpush1.msra.mxu0 %v34
  %183 = vmatprep.subr.mxu0 0.0
  %184 = vmatpush1.msra.mxu0 %v35
  %185 = vmatprep.subr.mxu0 0.0
  %186 = vmatpush1.msra.mxu0 %v36
  %187 = vmatprep.subr.mxu0 0.0
  %188 = vmatpush1.msra.mxu0 %v37
  %189 = vmatprep.subr.mxu0 0.0
  %190 = vmatpush1.msra.mxu0 %v38
  %191 = vmatprep.subr.mxu0 0.0
  %192 = vmatpush1.msra.mxu0 %v39
  %193 = vmatprep.subr.mxu0 0.0
  %194 = vmatpush1.msra.mxu0 %v40
  %195 = vmatprep.subr.mxu0 0.0
  %196 = vmatpush1.msra.mxu0 %v41
  %197 = vmatprep.subr.mxu0 0.0
  %198 = vmatpush1.msra.mxu0 %v42
  %199 = vmatprep.subr.mxu0 0.0
  %200 = vmatpush1.msra.mxu0 %v43
  %201 = vmatprep.subr.mxu0 0.0
  %202 = vmatpush1.msra.mxu0 %v44
  %203 = vmatprep.subr.mxu0 0.0
  %204 = vmatpush1.msra.mxu0 %v45
  %205 = vmatprep.subr.mxu0 0.0
  %206 = vmatpush1.msra.mxu0 %v46
  %207 = vmatprep.subr.mxu0 0.0
  %208 = vmatpush1.msra.mxu0 %v47
  %209 = vmatprep.subr.mxu0 0.0
  %210 = vmatpush1.msra.mxu0 %v48
  %211 = vmatprep.subr.mxu0 0.0
  %212 = vmatpush1.msra.mxu0 %v49
  %213 = vmatprep.subr.mxu0 0.0
  %214 = vmatpush1.msra.mxu0 %v50
  %215 = vmatprep.subr.mxu0 0.0
  %216 = vmatpush1.msra.mxu0 %v51
  %217 = vmatprep.subr.mxu0 0.0
  %218 = vmatpush1.msra.mxu0 %v52
  %219 = vmatprep.subr.mxu0 0.0
  %220 = vmatpush1.msra.mxu0 %v53
  %221 = vmatprep.mubr.f32.mxu0 %v15
  %222 = vmatmul.mubr.f32.gmra.mrb[0].mxu0 %v14
  %v223 = vpop.f32.mrb[0].mxu0
  %v224 = vadd.f32 %v155, %v223
  %v225 = vpop.f32.mrb[0].mxu0
  %226 = vdwg.mxu0
  %227 = vmatprep.subr.mxu0 0.0
  %228 = vmatpush1.msra.mxu0 %v54
  %229 = vmatprep.subr.mxu0 0.0
  %230 = vmatpush1.msra.mxu0 %v55
  %231 = vmatprep.subr.mxu0 0.0
  %232 = vmatpush1.msra.mxu0 %v56
  %233 = vmatprep.subr.mxu0 0.0
  %234 = vmatpush1.msra.mxu0 %v57
  %235 = vmatprep.subr.mxu0 0.0
  %236 = vmatpush1.msra.mxu0 %v58
  %237 = vmatprep.subr.mxu0 0.0
  %238 = vmatpush1.msra.mxu0 %v59
  %239 = vmatprep.subr.mxu0 0.0
  %240 = vmatpush1.msra.mxu0 %v60
  %241 = vmatprep.subr.mxu0 0.0
  %242 = vmatpush1.msra.mxu0 %v61
  %243 = vmatprep.subr.mxu0 0.0
  %244 = vmatpush1.msra.mxu0 %v62
  %245 = vmatprep.subr.mxu0 0.0
  %246 = vmatpush1.msra.mxu0 %v63
  %247 = vmatprep.subr.mxu0 0.0
  %248 = vmatpush1.msra.mxu0 %v64
  %249 = vmatprep.subr.mxu0 0.0
  %250 = vmatpush1.msra.mxu0 %v65
  %251 = vmatprep.subr.mxu0 0.0
  %252 = vmatpush1.msra.mxu0 %v66
  %253 = vmatprep.subr.mxu0 0.0
  %254 = vmatpush1.msra.mxu0 %v67
  %255 = vmatprep.subr.mxu0 0.0
  %256 = vmatpush1.msra.mxu0 %v68
  %257 = vmatprep.subr.mxu0 0.0
  %258 = vmatpush1.msra.mxu0 %v69
  %259 = vmatprep.subr.mxu0 0.0
  %260 = vmatpush1.msra.mxu0 %v70
  %261 = vmatprep.subr.mxu0 0.0
  %262 = vmatpush1.msra.mxu0 %v71
  %263 = vmatprep.subr.mxu0 0.0
  %264 = vmatpush1.msra.mxu0 %v72
  %265 = vmatprep.subr.mxu0 0.0
  %266 = vmatpush1.msra.mxu0 %v73
  %267 = vmatprep.subr.mxu0 0.0
  %268 = vmatpush1.msra.mxu0 %v74
  %269 = vmatprep.subr.mxu0 0.0
  %270 = vmatpush1.msra.mxu0 %v75
  %271 = vmatprep.subr.mxu0 0.0
  %272 = vmatpush1.msra.mxu0 %v76
  %273 = vmatprep.subr.mxu0 0.0
  %274 = vmatpush1.msra.mxu0 %v77
  %275 = vmatprep.subr.mxu0 0.0
  %276 = vmatpush1.msra.mxu0 %v78
  %277 = vmatprep.subr.mxu0 0.0
  %278 = vmatpush1.msra.mxu0 %v79
  %279 = vmatprep.subr.mxu0 0.0
  %280 = vmatpush1.msra.mxu0 %v80
  %281 = vmatprep.subr.mxu0 0.0
  %282 = vmatpush1.msra.mxu0 %v81
  %283 = vmatprep.subr.mxu0 0.0
  %284 = vmatpush1.msra.mxu0 %v82
  %285 = vmatprep.subr.mxu0 0.0
  %286 = vmatpush1.msra.mxu0 %v83
  %287 = vmatprep.subr.mxu0 0.0
  %288 = vmatpush1.msra.mxu0 %v84
  %289 = vmatprep.subr.mxu0 0.0
  %290 = vmatpush1.msra.mxu0 %v85
  %291 = vmatprep.mubr.f32.mxu0 %v17
  %292 = vmatmul.mubr.f32.gmra.mrb[0].mxu0 %v16
  %v293 = vpop.f32.mrb[0].mxu0
  %v294 = vadd.f32 %v224, %v293
  %v295 = vpop.f32.mrb[0].mxu0
  %296 = vdwg.mxu0
  %297 = vmatprep.subr.mxu0 0.0
  %298 = vmatpush1.msra.mxu0 %v86
  %299 = vmatprep.subr.mxu0 0.0
  %300 = vmatpush1.msra.mxu0 %v87
  %301 = vmatprep.subr.mxu0 0.0
  %302 = vmatpush1.msra.mxu0 %v88
  %303 = vmatprep.subr.mxu0 0.0
  %304 = vmatpush1.msra.mxu0 %v89
  %305 = vmatprep.subr.mxu0 0.0
  %306 = vmatpush1.msra.mxu0 %v90
  %307 = vmatprep.subr.mxu0 0.0
  %308 = vmatpush1.msra.mxu0 %v91
  %309 = vmatprep.subr.mxu0 0.0
  %310 = vmatpush1.msra.mxu0 %v92
  %311 = vmatprep.subr.mxu0 0.0
  %312 = vmatpush1.msra.mxu0 %v93
  %313 = vmatprep.subr.mxu0 0.0
  %314 = vmatpush1.msra.mxu0 %v94
  %315 = vmatprep.subr.mxu0 0.0
  %316 = vmatpush1.msra.mxu0 %v95
  %317 = vmatprep.subr.mxu0 0.0
  %318 = vmatpush1.msra.mxu0 %v96
  %319 = vmatprep.subr.mxu0 0.0
  %320 = vmatpush1.msra.mxu0 %v97
  %321 = vmatprep.subr.mxu0 0.0
  %322 = vmatpush1.msra.mxu0 %v98
  %323 = vmatprep.subr.mxu0 0.0
  %324 = vmatpush1.msra.mxu0 %v99
  %325 = vmatprep.subr.mxu0 0.0
  %326 = vmatpush1.msra.mxu0 %v100
  %327 = vmatprep.subr.mxu0 0.0
  %328 = vmatpush1.msra.mxu0 %v101
  %329 = vmatprep.subr.mxu0 0.0
  %330 = vmatpush1.msra.mxu0 %v102
  %331 = vmatprep.subr.mxu0 0.0
  %332 = vmatpush1.msra.mxu0 %v103
  %333 = vmatprep.subr.mxu0 0.0
  %334 = vmatpush1.msra.mxu0 %v104
  %335 = vmatprep.subr.mxu0 0.0
  %336 = vmatpush1.msra.mxu0 %v105
  %337 = vmatprep.subr.mxu0 0.0
  %338 = vmatpush1.msra.mxu0 %v106
  %339 = vmatprep.subr.mxu0 0.0
  %340 = vmatpush1.msra.mxu0 %v107
  %341 = vmatprep.subr.mxu0 0.0
  %342 = vmatpush1.msra.mxu0 %v108
  %343 = vmatprep.subr.mxu0 0.0
  %344 = vmatpush1.msra.mxu0 %v109
  %345 = vmatprep.subr.mxu0 0.0
  %346 = vmatpush1.msra.mxu0 %v110
  %347 = vmatprep.subr.mxu0 0.0
  %348 = vmatpush1.msra.mxu0 %v111
  %349 = vmatprep.subr.mxu0 0.0
  %350 = vmatpush1.msra.mxu0 %v112
  %351 = vmatprep.subr.mxu0 0.0
  %352 = vmatpush1.msra.mxu0 %v113
  %353 = vmatprep.subr.mxu0 0.0
  %354 = vmatpush1.msra.mxu0 %v114
  %355 = vmatprep.subr.mxu0 0.0
  %356 = vmatpush1.msra.mxu0 %v115
  %357 = vmatprep.subr.mxu0 0.0
  %358 = vmatpush1.msra.mxu0 %v116
  %359 = vmatprep.subr.mxu0 0.0
  %360 = vmatpush1.msra.mxu0 %v117
  %361 = vmatprep.mubr.f32.mxu0 %v19
  %362 = vmatmul.mubr.f32.gmra.mrb[0].mxu0 %v18
  %v363 = vpop.f32.mrb[0].mxu0
  %v364 = vadd.f32 %v294, %v363
  %v365 = vpop.f32.mrb[0].mxu0
  %366 = vdwg.mxu0
  %367 = vmatprep.subr.mxu0 0.0
  %368 = vmatpush1.msra.mxu0 %v118
  %369 = vmatprep.subr.mxu0 0.0
  %370 = vmatpush1.msra.mxu0 %v119
  %371 = vmatprep.subr.mxu0 0.0
  %372 = vmatpush1.msra.mxu0 %v120
  %373 = vmatprep.subr.mxu0 0.0
  %374 = vmatpush1.msra.mxu0 %v121
  %375 = vmatprep.subr.mxu0 0.0
  %376 = vmatpush1.msra.mxu0 %v122
  %377 = vmatprep.subr.mxu0 0.0
  %378 = vmatpush1.msra.mxu0 %v123
  %379 = vmatprep.subr.mxu0 0.0
  %380 = vmatpush1.msra.mxu0 %v124
  %381 = vmatprep.subr.mxu0 0.0
  %382 = vmatpush1.msra.mxu0 %v125
  %383 = vmatprep.subr.mxu0 0.0
  %384 = vmatpush1.msra.mxu0 %v126
  %385 = vmatprep.subr.mxu0 0.0
  %386 = vmatpush1.msra.mxu0 %v127
  %387 = vmatprep.subr.mxu0 0.0
  %388 = vmatpush1.msra.mxu0 %v128
  %389 = vmatprep.subr.mxu0 0.0
  %390 = vmatpush1.msra.mxu0 %v129
  %391 = vmatprep.subr.mxu0 0.0
  %392 = vmatpush1.msra.mxu0 %v130
  %393 = vmatprep.subr.mxu0 0.0
  %394 = vmatpush1.msra.mxu0 %v131
  %395 = vmatprep.subr.mxu0 0.0
  %396 = vmatpush1.msra.mxu0 %v132
  %397 = vmatprep.subr.mxu0 0.0
  %398 = vmatpush1.msra.mxu0 %v133
  %399 = vmatprep.subr.mxu0 0.0
  %400 = vmatpush1.msra.mxu0 %v134
  %401 = vmatprep.subr.mxu0 0.0
  %402 = vmatpush1.msra.mxu0 %v135
  %403 = vmatprep.subr.mxu0 0.0
  %404 = vmatpush1.msra.mxu0 %v136
  %405 = vmatprep.subr.mxu0 0.0
  %406 = vmatpush1.msra.mxu0 %v137
  %407 = vmatprep.subr.mxu0 0.0
  %408 = vmatpush1.msra.mxu0 %v138
  %409 = vmatprep.subr.mxu0 0.0
  %410 = vmatpush1.msra.mxu0 %v139
  %411 = vmatprep.subr.mxu0 0.0
  %412 = vmatpush1.msra.mxu0 %v140
  %413 = vmatprep.subr.mxu0 0.0
  %414 = vmatpush1.msra.mxu0 %v141
  %415 = vmatprep.subr.mxu0 0.0
  %416 = vmatpush1.msra.mxu0 %v142
  %417 = vmatprep.subr.mxu0 0.0
  %418 = vmatpush1.msra.mxu0 %v143
  %419 = vmatprep.subr.mxu0 0.0
  %420 = vmatpush1.msra.mxu0 %v144
  %421 = vmatprep.subr.mxu0 0.0
  %422 = vmatpush1.msra.mxu0 %v145
  %423 = vmatprep.subr.mxu0 0.0
  %424 = vmatpush1.msra.mxu0 %v146
  %425 = vmatprep.subr.mxu0 0.0
  %426 = vmatpush1.msra.mxu0 %v147
  %427 = vmatprep.subr.mxu0 0.0
  %428 = vmatpush1.msra.mxu0 %v148
  %429 = vmatprep.subr.mxu0 0.0
  %430 = vmatpush1.msra.mxu0 %v149
  %431 = vmatprep.mubr.f32.mxu0 %v21
  %432 = vmatmul.mubr.f32.gmra.mrb[0].mxu0 %v20
  %v433 = vpop.f32.mrb[0].mxu0
  %v434 = vadd.f32 %v364, %v433
  %v435 = vpop.f32.mrb[0].mxu0
  %436 = vdwg.mxu0
  %437 = vst [vmem:[%s3] sm:$0xff] %v434
  // Predicated region
  $region14: #{fully_connected_forward.1} parent=0 // pred_check
    _
  $region15: #{fully_connected_forward.1} parent=0 // pred_check_branch
    %439 = sbr.rel (0) target = $region17
  $region16: #{fully_connected_forward.1} parent=0 // pred_region
    _
  $region17: #{fully_connected_forward.1} parent=0 // pred_fallthru
    _
  // Predicated region
  $region18: #{fully_connected_forward.1} parent=0 // pred_check
    _
  $region19: #{fully_connected_forward.1} parent=0 // pred_check_branch
    %441 = sbr.rel (0) target = $region21
  $region20: #{fully_connected_forward.1} parent=0 // pred_region
    _
  $region21: #{fully_connected_forward.1} parent=0 // pred_fallthru
    _

</llo_original>
